<compile_context>
chip_gen: v7x
topology: tpu7x:2x2x1
jax: 0.10.0
libtpu: 0.0.40
codegen_flags: <defaults>
</compile_context>

<pallas_src>
import numpy as np
import jax
import jax.numpy as jnp
from jax.experimental import pallas as pl
from jax.experimental.pallas import tpu as pltpu


def _batch_tile(b):
    """Batch-tile size: as many batch elements per grid step as reasonable."""
    if b <= 8:
        return b
    for c in (8, 4, 2):
        if b % c == 0:
            return c
    return 1


def _minor_tile(dim):
    """Largest 128-multiple tile dividing `dim`, else the full dim (always legal)."""
    for c in (512, 256, 128):
        if dim > c and dim % c == 0:
            return c
    return dim


# ---------------------------------------------------------------------------
# Kernel A: RBF kernels + density channel (batch tile x target tile).
# ---------------------------------------------------------------------------
def _kernels_kernel(scal_ref, cxc_ref, cxr_ref, txr_ref, K_ref, Ks_ref, dens_ref):
    inv_gp = scal_ref[0]    # 1 / exp(sigma[-1])^2
    inv_den = scal_ref[1]   # 1 / exp(sigma[0])^2
    noise = scal_ref[2]     # exp(gp_noise)

    c_col = cxc_ref[...]    # (Bt, N, 1)

    # Gram matrix over context inputs: independent of the target tile, so it is
    # computed only on the first M-tile; the output block keeps the same block
    # index along the (arbitrary) M axis, stays resident in VMEM and is written
    # back once per batch tile.
    @pl.when(pl.program_id(1) == 0)
    def _():
        c_row = cxr_ref[...]                                    # (Bt, 1, N)
        d_cc = (c_col - c_row) ** 2                             # (Bt, N, N)
        K = jnp.exp(d_cc * (-0.5 * inv_gp))
        n = K.shape[-1]
        rid = jax.lax.broadcasted_iota(jnp.int32, (n, n), 0)
        cid = jax.lax.broadcasted_iota(jnp.int32, (n, n), 1)
        # single select on the diagonal instead of materialising an eye matrix
        K_ref[...] = jnp.where((rid == cid)[None, :, :], K + noise, K)

    # Cross kernel context -> target tile, and density channel.
    t_row = txr_ref[...]                                        # (Bt, 1, tM)
    d_ct = (c_col - t_row) ** 2                                 # (Bt, N, tM)
    Ks_ref[...] = jnp.exp(d_ct * (-0.5 * inv_gp))
    w = jnp.exp(d_ct * (-0.5 * inv_den))
    dens_ref[...] = jnp.sum(w, axis=1, keepdims=True)           # (Bt, 1, tM)


# ---------------------------------------------------------------------------
# Kernel B: target-major fused GP mean + density normalisation + projection.
# ---------------------------------------------------------------------------
def _project_kernel(beta_ref, lk_ref, dens_ref, w0_ref, b_ref, o_ref):
    beta = beta_ref[...]        # (Bt, Cout, N)  = W[:,1:] @ alpha^T (pre-folded)
    lk = lk_ref[...]            # (Bt, N, tM)    = L^{-1} K_s
    dens = dens_ref[...]        # (Bt, 1, tM)

    # Target-major GP predictive mean, already carrying the linear projection:
    #   mean_t[b, o, m] = sum_n beta[b, o, n] * L_k[b, n, m]
    mean_t = jax.lax.dot_general(
        beta, lk, (((2,), (1,)), ((0,), (0,))),
        preferred_element_type=jnp.float32)                     # (Bt, Cout, tM)

    inv_d = pl.reciprocal(dens + 1e-8)                          # EUP, (Bt, 1, tM)
    out = mean_t * inv_d                                        # density norm
    out = out + dens * w0_ref[...][None, :, :]                  # density channel
    out = out + b_ref[...][None, :, :]                          # bias
    o_ref[...] = out.astype(o_ref.dtype)


# ---------------------------------------------------------------------------
# Wrapper.
# ---------------------------------------------------------------------------
def gp_conv_deep_set_forward(context_in, context_out, target_in, params,
                             *, matmul_dtype=jnp.float32):
    B, N, _ = context_in.shape
    M = target_in.shape[1]
    Cin = context_out.shape[2]
    W_t = params["proj_w"].astype(jnp.float32)      # (Cout, Cin+1)  torch layout
    bias = params["proj_b"].astype(jnp.float32)     # (Cout,)
    Cout = W_t.shape[0]
    sigma = params["sigma"]
    gp_noise = params["gp_noise"]

    Bt = _batch_tile(B)
    tM = _minor_tile(M)
    nb, nm = B // Bt, M // tM

    scale_gp = jnp.exp(sigma[-1]) ** 2
    scale_den = jnp.exp(sigma[0]) ** 2
    scal = jnp.stack([1.0 / scale_gp, 1.0 / scale_den,
                      jnp.exp(gp_noise[0])]).astype(jnp.float32)

    cx_col = context_in.astype(jnp.float32)                           # (B, N, 1)
    cx_row = jnp.transpose(cx_col, (0, 2, 1))                         # (B, 1, N)
    tx_row = jnp.transpose(target_in.astype(jnp.float32), (0, 2, 1))  # (B, 1, M)

    K, Ks, dens = pl.pallas_call(
        _kernels_kernel,
        grid=(nb, nm),
        in_specs=[
            pl.BlockSpec(memory_space=pltpu.SMEM),                    # scalars
            pl.BlockSpec((Bt, N, 1), lambda b, m: (b, 0, 0)),
            pl.BlockSpec((Bt, 1, N), lambda b, m: (b, 0, 0)),
            pl.BlockSpec((Bt, 1, tM), lambda b, m: (b, 0, m)),
        ],
        out_specs=[
            pl.BlockSpec((Bt, N, N), lambda b, m: (b, 0, 0)),
            pl.BlockSpec((Bt, N, tM), lambda b, m: (b, 0, m)),
            pl.BlockSpec((Bt, 1, tM), lambda b, m: (b, 0, m)),
        ],
        out_shape=[
            jax.ShapeDtypeStruct((B, N, N), jnp.float32),
            jax.ShapeDtypeStruct((B, N, M), jnp.float32),
            jax.ShapeDtypeStruct((B, 1, M), jnp.float32),
        ],
        compiler_params=pltpu.CompilerParams(
            dimension_semantics=("parallel", "arbitrary"),
            vmem_limit_bytes=64 * 1024 * 1024),
    )(scal, cx_col, cx_row, tx_row)

    # Sequential linear algebra stays in JAX (see TODO at top of file).
    L = jnp.linalg.cholesky(K)                                        # (B, N, N)
    L_k = jax.scipy.linalg.solve_triangular(L, Ks, lower=True)        # (B, N, M)
    alpha = jax.scipy.linalg.solve_triangular(
        L, context_out.astype(jnp.float32), lower=True)               # (B, N, Cin)

    # Fold the non-density projection columns into alpha so kernel B is a single
    # lane-dense batched matmul with the contraction over N (instead of two
    # skinny matmuls with contraction over Cin/Cout):
    #   beta[b, o, n] = sum_c W[o, 1 + c] * alpha[b, n, c]
    w0 = W_t[:, :1]                                                   # (Cout, 1)
    W1 = W_t[:, 1:]                                                   # (Cout, Cin)
    beta = jnp.einsum("bnc,oc->bon", alpha, W1)                       # (B, Cout, N)
    b_col = bias.reshape(Cout, 1)

    out_t = pl.pallas_call(
        _project_kernel,
        grid=(nb, nm),
        in_specs=[
            pl.BlockSpec((Bt, Cout, N), lambda b, m: (b, 0, 0)),
            pl.BlockSpec((Bt, N, tM), lambda b, m: (b, 0, m)),
            pl.BlockSpec((Bt, 1, tM), lambda b, m: (b, 0, m)),
            pl.BlockSpec((Cout, 1), lambda b, m: (0, 0)),
            pl.BlockSpec((Cout, 1), lambda b, m: (0, 0)),
        ],
        out_specs=pl.BlockSpec((Bt, Cout, tM), lambda b, m: (b, 0, m)),
        out_shape=jax.ShapeDtypeStruct((B, Cout, M), jnp.float32),
        compiler_params=pltpu.CompilerParams(
            dimension_semantics=("parallel", "parallel"),
            vmem_limit_bytes=64 * 1024 * 1024),
    )(beta.astype(matmul_dtype), L_k.astype(matmul_dtype), dens, w0, b_col)

    # Cheap layout fix in XLA: (B, Cout, M) -> (B, M, Cout).
    return jnp.transpose(out_t, (0, 2, 1))


# ---------------------------------------------------------------------------
# Pure-JAX reference (mirrors the PyTorch forward, eval path).
# ---------------------------------------------------------------------------
def reference_forward(context_in, context_out, target_in, params):
    sigma = params["sigma"]
    gp_noise = params["gp_noise"]
    W_t = params["proj_w"]
    bias = params["proj_b"]
    scale_gp = jnp.exp(sigma[-1]) ** 2
    scale_den = jnp.exp(sigma[0]) ** 2

    d_cc = jnp.sum((context_in[:, :, None, :] - context_in[:, None, :, :]) ** 2, -1)
    K = jnp.exp(-0.5 * d_cc / scale_gp)
    K = K + jnp.eye(K.shape[-1], dtype=K.dtype) * jnp.exp(gp_noise[0])
    L = jnp.linalg.cholesky(K)

    d_ct = jnp.sum((context_in[:, :, None, :] - target_in[:, None, :, :]) ** 2, -1)
    Ks = jnp.exp(-0.5 * d_ct / scale_gp)
    L_k = jax.scipy.linalg.solve_triangular(L, Ks, lower=True)
    alpha = jax.scipy.linalg.solve_triangular(L, context_out, lower=True)
    output = jnp.einsum("bnm,bnc->bmc", L_k, alpha)

    w = jnp.exp(-0.5 * d_ct / scale_den)
    density = jnp.sum(w, axis=1)[..., None]
    output = output / (density + 1e-8)
    output = jnp.concatenate([density, output], axis=-1)
    return output @ W_t.T + bias


if __name__ == "__main__":
    B, N, M, Cin, Cout = 2, 8, 16, 4, 8
    in_channels = Cin + 1  # density channel appended

    key = jax.random.PRNGKey(0)
    k1, k2, k3, k4 = jax.random.split(key, 4)
    context_in = jax.random.normal(k1, (B, N, 1), jnp.float32)
    context_out = jax.random.normal(k2, (B, N, Cin), jnp.float32)
    target_in = jax.random.normal(k3, (B, M, 1), jnp.float32)

    # Deterministic parameter init, matching the module's __init__:
    #   sigma = log(0.1) * ones(Cin+1); gp_noise = -14; projection: xavier_normal
    #   weight (Cout, Cin+1) with gain 1, bias = 0.
    xavier_std = float(np.sqrt(2.0 / (in_channels + Cout)))
    params = dict(
        sigma=jnp.full((in_channels,), float(np.log(0.1)), jnp.float32),
        gp_noise=jnp.full((1,), -14.0, jnp.float32),
        gp_lambda=jnp.zeros((1,), jnp.float32),  # unused in eval path
        proj_w=jax.random.normal(k4, (Cout, in_channels), jnp.float32) * xavier_std,
        proj_b=jnp.zeros((Cout,), jnp.float32),
    )

    # Full-precision path: must match the reference tightly.
    out = gp_conv_deep_set_forward(context_in, context_out, target_in, params)
    out = jax.block_until_ready(out)
    assert out.shape == (B, M, Cout)

    ref = reference_forward(context_in, context_out, target_in, params)
    np.testing.assert_allclose(np.asarray(out), np.asarray(ref), rtol=1e-4, atol=1e-5)

    # bf16 fast path for kernel B (K / Cholesky / solves stay f32): looser check.
    out_bf16 = gp_conv_deep_set_forward(
        context_in, context_out, target_in, params, matmul_dtype=jnp.bfloat16)
    out_bf16 = jax.block_until_ready(out_bf16)
    np.testing.assert_allclose(np.asarray(out_bf16), np.asarray(ref),
                               rtol=5e-2, atol=2e-2)

    print("KERNEL_OK")
</pallas_src>

<mosaic_0001>
module attributes {stable_mosaic.version = 11 : i64} {
  func.func @_kernels_kernel(%arg0: i32, %arg1: i32, %arg2: memref<3xf32, #tpu.memory_space<smem>>, %arg3: memref<2x8x1xf32, #tpu.memory_space<vmem>>, %arg4: memref<2x1x8xf32, #tpu.memory_space<vmem>>, %arg5: memref<2x1x16xf32, #tpu.memory_space<vmem>>, %arg6: memref<2x8x8xf32, #tpu.memory_space<vmem>>, %arg7: memref<2x8x16xf32, #tpu.memory_space<vmem>>, %arg8: memref<2x1x16xf32, #tpu.memory_space<vmem>>) attributes {dimension_semantics = [#tpu.dimension_semantics<parallel>, #tpu.dimension_semantics<arbitrary>], iteration_bounds = array<i64: 1, 1>, scalar_prefetch = 0 : i64, scratch_operands = 0 : i64, tpu.core_type = #tpu.core_type<tc>, window_params = [{transform_indices = @transform_0, window_bounds = array<i64: 3>}, {transform_indices = @transform_1, window_bounds = array<i64: 2, 8, 1>}, {transform_indices = @transform_2, window_bounds = array<i64: 2, 1, 8>}, {transform_indices = @transform_3, window_bounds = array<i64: 2, 1, 16>}, {transform_indices = @transform_4, window_bounds = array<i64: 2, 8, 8>}, {transform_indices = @transform_5, window_bounds = array<i64: 2, 8, 16>}, {transform_indices = @transform_6, window_bounds = array<i64: 2, 1, 16>}]} {
    %c0 = arith.constant 0 : index
    %0 = memref.load %arg2[%c0] : memref<3xf32, #tpu.memory_space<smem>>
    %c1 = arith.constant 1 : index
    %1 = memref.load %arg2[%c1] : memref<3xf32, #tpu.memory_space<smem>>
    %c2 = arith.constant 2 : index
    %2 = memref.load %arg2[%c2] : memref<3xf32, #tpu.memory_space<smem>>
    %c0_0 = arith.constant 0 : index
    %c0_1 = arith.constant 0 : index
    %c0_2 = arith.constant 0 : index
    %3 = vector.load %arg3[%c0_0, %c0_1, %c0_2] : memref<2x8x1xf32, #tpu.memory_space<vmem>>, vector<2x8x1xf32>
    %c0_i32 = arith.constant 0 : i32
    %4 = arith.cmpi eq, %arg1, %c0_i32 : i32
    %5 = arith.extui %4 : i1 to i32
    %c0_i32_3 = arith.constant 0 : i32
    %6 = arith.cmpi ne, %5, %c0_i32_3 : i32
    scf.if %6 {
      %c0_15 = arith.constant 0 : index
      %c0_16 = arith.constant 0 : index
      %c0_17 = arith.constant 0 : index
      %24 = vector.load %arg4[%c0_15, %c0_16, %c0_17] : memref<2x1x8xf32, #tpu.memory_space<vmem>>, vector<2x1x8xf32>
      %25 = vector.broadcast %3 : vector<2x8x1xf32> to vector<2x8x8xf32>
      %26 = vector.broadcast %24 : vector<2x1x8xf32> to vector<2x8x8xf32>
      %27 = arith.subf %25, %26 : vector<2x8x8xf32>
      %28 = arith.mulf %27, %27 : vector<2x8x8xf32>
      %cst_18 = arith.constant -5.000000e-01 : f32
      %29 = arith.mulf %cst_18, %0 : f32
      %30 = vector.broadcast %29 : f32 to vector<2x8x8xf32>
      %31 = arith.mulf %28, %30 : vector<2x8x8xf32>
      %32 = math.exp %31 : vector<2x8x8xf32>
      %33 = tpu.iota {dimensions = array<i32: 0>} : vector<8x8xi32>
      %34 = tpu.iota {dimensions = array<i32: 1>} : vector<8x8xi32>
      %35 = arith.cmpi eq, %33, %34 : vector<8x8xi32>
      %36 = vector.shape_cast %35 : vector<8x8xi1> to vector<1x8x8xi1>
      %37 = vector.broadcast %2 : f32 to vector<2x8x8xf32>
      %38 = arith.addf %32, %37 : vector<2x8x8xf32>
      %39 = vector.shape_cast %36 : vector<1x8x8xi1> to vector<1x8x8xi1>
      %40 = vector.broadcast %39 : vector<1x8x8xi1> to vector<2x8x8xi1>
      %41 = arith.select %40, %38, %32 : vector<2x8x8xi1>, vector<2x8x8xf32>
      %c0_19 = arith.constant 0 : index
      %c0_20 = arith.constant 0 : index
      %c0_21 = arith.constant 0 : index
      %42 = vector.load %arg6[%c0_19, %c0_20, %c0_21] : memref<2x8x8xf32, #tpu.memory_space<vmem>>, vector<2x8x8xf32>
      tpu.vector_store %arg6[%c0_19, %c0_20, %c0_21], %41 {strides = array<i32>} : memref<2x8x8xf32, #tpu.memory_space<vmem>>, vector<2x8x8xf32>,
    } else {
    }
    %c0_4 = arith.constant 0 : index
    %c0_5 = arith.constant 0 : index
    %c0_6 = arith.constant 0 : index
    %7 = vector.load %arg5[%c0_4, %c0_5, %c0_6] : memref<2x1x16xf32, #tpu.memory_space<vmem>>, vector<2x1x16xf32>
    %8 = vector.broadcast %3 : vector<2x8x1xf32> to vector<2x8x16xf32>
    %9 = vector.broadcast %7 : vector<2x1x16xf32> to vector<2x8x16xf32>
    %10 = arith.subf %8, %9 : vector<2x8x16xf32>
    %11 = arith.mulf %10, %10 : vector<2x8x16xf32>
    %cst = arith.constant -5.000000e-01 : f32
    %12 = arith.mulf %cst, %0 : f32
    %13 = vector.broadcast %12 : f32 to vector<2x8x16xf32>
    %14 = arith.mulf %11, %13 : vector<2x8x16xf32>
    %15 = math.exp %14 : vector<2x8x16xf32>
    %c0_7 = arith.constant 0 : index
    %c0_8 = arith.constant 0 : index
    %c0_9 = arith.constant 0 : index
    %16 = vector.load %arg7[%c0_7, %c0_8, %c0_9] : memref<2x8x16xf32, #tpu.memory_space<vmem>>, vector<2x8x16xf32>
    tpu.vector_store %arg7[%c0_7, %c0_8, %c0_9], %15 {strides = array<i32>} : memref<2x8x16xf32, #tpu.memory_space<vmem>>, vector<2x8x16xf32>,
    %cst_10 = arith.constant -5.000000e-01 : f32
    %17 = arith.mulf %cst_10, %1 : f32
    %18 = vector.broadcast %17 : f32 to vector<2x8x16xf32>
    %19 = arith.mulf %11, %18 : vector<2x8x16xf32>
    %20 = math.exp %19 : vector<2x8x16xf32>
    %cst_11 = arith.constant dense<0.000000e+00> : vector<2x16xf32>
    %21 = vector.multi_reduction <add>, %20, %cst_11 [1] : vector<2x8x16xf32> to vector<2x16xf32>
    %22 = vector.shape_cast %21 : vector<2x16xf32> to vector<2x1x16xf32>
    %c0_12 = arith.constant 0 : index
    %c0_13 = arith.constant 0 : index
    %c0_14 = arith.constant 0 : index
    %23 = vector.load %arg8[%c0_12, %c0_13, %c0_14] : memref<2x1x16xf32, #tpu.memory_space<vmem>>, vector<2x1x16xf32>
    tpu.vector_store %arg8[%c0_12, %c0_13, %c0_14], %22 {strides = array<i32>} : memref<2x1x16xf32, #tpu.memory_space<vmem>>, vector<2x1x16xf32>,
    return
  }
  func.func @transform_0(%arg0: i32, %arg1: i32) -> i32 {
    %c0_i32 = arith.constant 0 : i32
    %c0_i32_0 = arith.constant 0 : i32
    return %c0_i32 : i32
  }
  func.func @transform_1(%arg0: i32, %arg1: i32) -> (i32, i32, i32) {
    %c0_i32 = arith.constant 0 : i32
    %c0_i32_0 = arith.constant 0 : i32
    %c0_i32_1 = arith.constant 0 : i32
    return %arg0, %c0_i32, %c0_i32_0 : i32, i32, i32
  }
  func.func @transform_2(%arg0: i32, %arg1: i32) -> (i32, i32, i32) {
    %c0_i32 = arith.constant 0 : i32
    %c0_i32_0 = arith.constant 0 : i32
    %c0_i32_1 = arith.constant 0 : i32
    return %arg0, %c0_i32, %c0_i32_0 : i32, i32, i32
  }
  func.func @transform_3(%arg0: i32, %arg1: i32) -> (i32, i32, i32) {
    %c0_i32 = arith.constant 0 : i32
    %c0_i32_0 = arith.constant 0 : i32
    return %arg0, %c0_i32, %arg1 : i32, i32, i32
  }
  func.func @transform_4(%arg0: i32, %arg1: i32) -> (i32, i32, i32) {
    %c0_i32 = arith.constant 0 : i32
    %c0_i32_0 = arith.constant 0 : i32
    %c0_i32_1 = arith.constant 0 : i32
    return %arg0, %c0_i32, %c0_i32_0 : i32, i32, i32
  }
  func.func @transform_5(%arg0: i32, %arg1: i32) -> (i32, i32, i32) {
    %c0_i32 = arith.constant 0 : i32
    %c0_i32_0 = arith.constant 0 : i32
    return %arg0, %c0_i32, %arg1 : i32, i32, i32
  }
  func.func @transform_6(%arg0: i32, %arg1: i32) -> (i32, i32, i32) {
    %c0_i32 = arith.constant 0 : i32
    %c0_i32_0 = arith.constant 0 : i32
    return %arg0, %c0_i32, %arg1 : i32, i32, i32
  }
}

</mosaic_0001>

<llo_original>
// kernel: tpu_custom_call.1
$region0: #{tpu_custom_call.1}
  #allocation0 [shape = 'u32[]', space=smem, size = 0x4, offset = 0x4, fixed_abs, tag = 'smem constant byte address 0x4 - core index']
  #allocation1 [shape = 'u32[144,128]{1,0:T(1,128)}', space=vmem, size = 0x12000, scoped, tag = 'internal scratch']
  %s0 = inlined_call_operand.hbm [shape: f32[3], index: 0, kind: input, shape index: {}]
  %s1 = inlined_call_operand.hbm [shape: f32[2,8,1], index: 1, kind: input, shape index: {}]
  %s2 = inlined_call_operand.hbm [shape: f32[2,1,8], index: 2, kind: input, shape index: {}]
  %s3 = inlined_call_operand.hbm [shape: f32[2,1,16], index: 3, kind: input, shape index: {}]
  %s4 = inlined_call_operand.hbm [shape: f32[2,8,8], index: 4, kind: output, shape index: {0}]
  %s5 = inlined_call_operand.hbm [shape: f32[2,8,16], index: 5, kind: output, shape index: {1}]
  %s6 = inlined_call_operand.hbm [shape: f32[2,1,16], index: 6, kind: output, shape index: {2}]
  %7 = xla_tuple %s4, %s5, %s6
  %s8 = sld [smem:[#allocation0]]
  $region62: #{tpu_custom_call.1} parent=0
    _
  %s10 = ssub.s32 1, %s8
  %s11 = scalar_select 0, %s10, %s8
  $region1: #{tpu_custom_call.1} parent=0
    #allocation2 [shape = 'u8[512]{0}', space=smem, size = 0x200, scoped, tag = 'input window, operand 0, single buffered']
    #allocation3 [shape = 's32[1]{0}', space=sflag, size = 0x4, scoped, tag = 'scoped memory for tpu_custom_call.1']
    #allocation4 [shape = 's32[1]{0}', space=sflag, size = 0x4, scoped, tag = 'scoped memory for tpu_custom_call.1']
    #allocation5 [shape = 's32[1]{0}', space=sflag, size = 0x4, scoped, tag = 'scoped memory for tpu_custom_call.1']
    #allocation6 [shape = 'u8[8192]{0}', space=vmem, size = 0x2000, scoped, tag = 'input window, operand 1, single buffered']
    #allocation7 [shape = 'u8[1024]{0}', space=vmem, size = 0x400, scoped, tag = 'input window, operand 2, single buffered']
    #allocation8 [shape = 's32[1]{0}', space=sflag, size = 0x4, scoped, tag = 'scoped memory for tpu_custom_call.1']
    #allocation9 [shape = 'u8[1024]{0}', space=vmem, size = 0x400, scoped, tag = 'input window, operand 3, single buffered']
    #allocation10 [shape = 'u8[8192]{0}', space=vmem, size = 0x2000, scoped, tag = 'output window, operand 0, single buffered']
    #allocation11 [shape = 'u8[8192]{0}', space=vmem, size = 0x2000, scoped, tag = 'output window, operand 1, single buffered']
    #allocation12 [shape = 's32[1]{0}', space=sflag, size = 0x4, scoped, tag = 'scoped memory for tpu_custom_call.1']
    #allocation13 [shape = 'u8[1024]{0}', space=vmem, size = 0x400, scoped, tag = 'output window, operand 2, single buffered']
    %12 = vsyncpa [#allocation5], 0
    %13 = vsyncpa [#allocation3], 0
    %14 = vsyncpa [#allocation8], 0
    %15 = vsyncpa [#allocation4], 0
    %16 = vsyncpa [#allocation12], 0
    // Predicated region
    $region2: #{tpu_custom_call.1} parent=1 // pred_check
      _
    $region3: #{tpu_custom_call.1} parent=1 // pred_check_branch
      %18 = sbr.rel (0) target = $region5
    $region4: #{tpu_custom_call.1} parent=1 // pred_region
      %s20 = ssub.s32 16, 16
      %21 = vsyncadd [#allocation5], %s20
      %24 = dma.hbm_to_smem %s0, 16, [#allocation2], [#allocation5]
    $region5: #{tpu_custom_call.1} parent=1 // pred_fallthru
      _
    // Predicated region
    $region6: #{tpu_custom_call.1} parent=1 // pred_check
      _
    $region7: #{tpu_custom_call.1} parent=1 // pred_check_branch
      %26 = sbr.rel (0) target = $region9
    $region8: #{tpu_custom_call.1} parent=1 // pred_region
      %s28 = ssub.s32 256, 256
      %29 = vsyncadd [#allocation3], %s28
      %s30 = sshll.u32 [#allocation6], 4
      %s31 = int_to_ptr.vmem [resolvable:$true] %s30
      %36 = dma.hbm_to_vmem [thread:$0]  %s1, 256, %s31, [#allocation3], 128, 128, 8
    $region9: #{tpu_custom_call.1} parent=1 // pred_fallthru
      _
    // Predicated region
    $region10: #{tpu_custom_call.1} parent=1 // pred_check
      _
    $region11: #{tpu_custom_call.1} parent=1 // pred_check_branch
      %38 = sbr.rel (0) target = $region13
    $region12: #{tpu_custom_call.1} parent=1 // pred_region
      %s40 = ssub.s32 32, 32
      %41 = vsyncadd [#allocation8], %s40
      %s42 = sshll.u32 [#allocation7], 4
      %s43 = int_to_ptr.vmem [resolvable:$true] %s42
      %48 = dma.hbm_to_vmem [thread:$0]  %s2, 32, %s43, [#allocation8], 16, 16, 1
    $region13: #{tpu_custom_call.1} parent=1 // pred_fallthru
      _
    // Predicated region
    $region14: #{tpu_custom_call.1} parent=1 // pred_check
      _
    $region15: #{tpu_custom_call.1} parent=1 // pred_check_branch
      %50 = sbr.rel (0) target = $region17
    $region16: #{tpu_custom_call.1} parent=1 // pred_region
      %s52 = ssub.s32 32, 32
      %53 = vsyncadd [#allocation8], %s52
      %s54 = sshll.u32 [#allocation9], 4
      %s55 = int_to_ptr.vmem [resolvable:$true] %s54
      %60 = dma.hbm_to_vmem [thread:$0]  %s3, 32, %s55, [#allocation8], 16, 16, 1
    $region17: #{tpu_custom_call.1} parent=1 // pred_fallthru
      _
    // Predicated region
    $region18: #{tpu_custom_call.1} parent=1 // pred_check
      _
    $region19: #{tpu_custom_call.1} parent=1 // pred_check_branch
      %62 = sbr.rel (0) target = $region21
    $region20: #{tpu_custom_call.1} parent=1 // pred_region
      %63 = dma.done [#allocation5], 16
    $region21: #{tpu_custom_call.1} parent=1 // pred_fallthru
      _
    // Predicated region
    $region22: #{tpu_custom_call.1} parent=1 // pred_check
      _
    $region23: #{tpu_custom_call.1} parent=1 // pred_check_branch
      %65 = sbr.rel (0) target = $region25
    $region24: #{tpu_custom_call.1} parent=1 // pred_region
      %66 = dma.done [#allocation3], 256
    $region25: #{tpu_custom_call.1} parent=1 // pred_fallthru
      _
    // Predicated region
    $region26: #{tpu_custom_call.1} parent=1 // pred_check
      _
    $region27: #{tpu_custom_call.1} parent=1 // pred_check_branch
      %68 = sbr.rel (0) target = $region29
    $region28: #{tpu_custom_call.1} parent=1 // pred_region
      %69 = dma.done [#allocation8], 32
    $region29: #{tpu_custom_call.1} parent=1 // pred_fallthru
      _
    // Predicated region
    $region30: #{tpu_custom_call.1} parent=1 // pred_check
      _
    $region31: #{tpu_custom_call.1} parent=1 // pred_check_branch
      %71 = sbr.rel (0) target = $region33
    $region32: #{tpu_custom_call.1} parent=1 // pred_region
      %72 = dma.done [#allocation8], 32
    $region33: #{tpu_custom_call.1} parent=1 // pred_fallthru
      _
    %73 = sfence
    %s74 = sld [smem:[#allocation2]]
    %s75 = sld [smem:[#allocation2 + $0x1]]
    %s76 = sld [smem:[#allocation2 + $0x2]]
    %v77 = vld [vmem:[#allocation6] sm:$0xff]
    %v78 = vld [vmem:[#allocation6 + $0x8] sm:$0xff]
    %p79 = scmp.eq.s32.totalorder 0, 0
    // Predicated region
    $region34: #{tpu_custom_call.1} parent=1 // pred_check
      %p80 = pneg %p79
    $region35: #{tpu_custom_call.1} parent=1 // pred_check_branch
      %82 = sbr.rel (%p80) target = $region37
    $region36: #{tpu_custom_call.1} parent=1 // pred_region
      %v83 = vld [vmem:[#allocation7] sm:$0x1]
      %v84 = vld [vmem:[#allocation7 + $0x1] sm:$0x1]
      %86 = vset.pattern.permute.xlu0 0
      %87 = vperm.xlu0 %86, %v77
      %v88 = vpop.permute.xlu0 %87
      %91 = vset.pattern.permute.xlu0 0
      %92 = vperm.xlu0 %91, %v78
      %v93 = vpop.permute.xlu0 %92
      %v97 = vlaneseq
      %v98 = vshrl.u32 %v97, 7
      %v99 = vsub.s32 0, %v98
      %v100 = vrot.slane %v83, %v99
      %v101 = vlaneseq
      %v102 = vshrl.u32 %v101, 7
      %v103 = vsub.s32 0, %v102
      %v104 = vrot.slane %v84, %v103
      %v107 = vsub.f32 %v88, %v100
      %v108 = vsub.f32 %v93, %v104
      %v109 = vmul.f32 %v107, %v107
      %v110 = vmul.f32 %v108, %v108
      %s111 = smul.f32 %s74, -0.5
      %v112 = vstv %s111
      %v113 = vmul.f32 %v109, %v112
      %v114 = vmul.f32 %v110, %v112
      %v115 = vmul.f32 %v113, 1.442695
      %v116 = vpow.pop %v115
      %v117 = vmul.f32 %v114, 1.442695
      %v118 = vpow.pop %v117
      %v119 = vlaneseq
      %v120 = vshrl.u32 %v119, 7
      %v121 = vlaneseq
      %v122 = vand.u32 %v121, 127
      %vm123 = vcmp.eq.s32.totalorder %v120, %v122
      %v124 = vstv %s76
      %v125 = vadd.f32 %v116, %v124
      %v126 = vadd.f32 %v118, %v124
      %v127 = vsel %vm123, 1, 0
      %vm128 = vcmp.eq.s32.totalorder %v127, 1
      %v129 = vsel %vm128, %v125, %v116
      %v130 = vsel %vm128, %v126, %v118
      %vm131 = vcmask 64512
      %132 = vst.msk [vmem:[#allocation10] sm:$0xff] %vm131, %v129
      %133 = vst.msk [vmem:[#allocation10 + $0x8] sm:$0xff] %vm131, %v130
    $region37: #{tpu_custom_call.1} parent=1 // pred_fallthru
      _
    %v134 = vld [vmem:[#allocation9] sm:$0x1]
    %v135 = vld [vmem:[#allocation9 + $0x1] sm:$0x1]
    %137 = vset.pattern.permute.xlu0 0
    %138 = vperm.xlu0 %137, %v77
    %v139 = vpop.permute.xlu0 %138
    %142 = vset.pattern.permute.xlu0 0
    %143 = vperm.xlu0 %142, %v78
    %v144 = vpop.permute.xlu0 %143
    %v148 = vlaneseq
    %v149 = vshrl.u32 %v148, 7
    %v150 = vsub.s32 0, %v149
    %v151 = vrot.slane %v134, %v150
    %v152 = vlaneseq
    %v153 = vshrl.u32 %v152, 7
    %v154 = vsub.s32 0, %v153
    %v155 = vrot.slane %v135, %v154
    %v158 = vsub.f32 %v139, %v151
    %v159 = vsub.f32 %v144, %v155
    %v160 = vmul.f32 %v158, %v158
    %v161 = vmul.f32 %v159, %v159
    %s162 = smul.f32 %s74, -0.5
    %v163 = vstv %s162
    %v164 = vmul.f32 %v160, %v163
    %v165 = vmul.f32 %v161, %v163
    %v166 = vmul.f32 %v164, 1.442695
    %v167 = vpow.pop %v166
    %v168 = vmul.f32 %v165, 1.442695
    %v169 = vpow.pop %v168
    %vm170 = vcmask 130048
    %171 = vst.msk [vmem:[#allocation11] sm:$0xff] %vm170, %v167
    %172 = vst.msk [vmem:[#allocation11 + $0x8] sm:$0xff] %vm170, %v169
    %s173 = smul.f32 %s75, -0.5
    %v174 = vstv %s173
    %v175 = vmul.f32 %v160, %v174
    %v176 = vmul.f32 %v161, %v174
    %v177 = vmul.f32 %v175, 1.442695
    %v178 = vpow.pop %v177
    %v179 = vmul.f32 %v176, 1.442695
    %v180 = vpow.pop %v179
    %v181 = vsel %vm170, %v178, 0.0
    %v182 = vrot.slane %v181, 4
    %v183 = vadd.f32 %v181, %v182
    %v184 = vrot.slane %v183, 2
    %v185 = vadd.f32 %v183, %v184
    %v186 = vrot.slane %v185, 1
    %v187 = vadd.f32 %v185, %v186
    %v188 = vsel %vm170, %v180, 0.0
    %v189 = vrot.slane %v188, 4
    %v190 = vadd.f32 %v188, %v189
    %v191 = vrot.slane %v190, 2
    %v192 = vadd.f32 %v190, %v191
    %v193 = vrot.slane %v192, 1
    %v194 = vadd.f32 %v192, %v193
    %vm195 = vcmask 122880
    %196 = vst.msk [vmem:[#allocation13] sm:$0x1] %vm195, %v187
    %197 = vst.msk [vmem:[#allocation13 + $0x1] sm:$0x1] %vm195, %v194
    // Predicated region
    $region38: #{tpu_custom_call.1} parent=1 // pred_check
      _
    $region39: #{tpu_custom_call.1} parent=1 // pred_check_branch
      %199 = sbr.rel (0) target = $region41
    $region40: #{tpu_custom_call.1} parent=1 // pred_region
      %s201 = ssub.s32 256, 256
      %202 = vsyncadd [#allocation4], %s201
      %s203 = sshll.u32 [#allocation10], 4
      %s204 = int_to_ptr.vmem [resolvable:$true] %s203
      %209 = dma.vmem_to_hbm [thread:$0]  %s204, 256, %s4, [#allocation4], 128, 128, 8
    $region41: #{tpu_custom_call.1} parent=1 // pred_fallthru
      _
    // Predicated region
    $region42: #{tpu_custom_call.1} parent=1 // pred_check
      _
    $region43: #{tpu_custom_call.1} parent=1 // pred_check_branch
      %211 = sbr.rel (0) target = $region45
    $region44: #{tpu_custom_call.1} parent=1 // pred_region
      %s213 = ssub.s32 256, 256
      %214 = vsyncadd [#allocation12], %s213
      %s215 = sshll.u32 [#allocation11], 4
      %s216 = int_to_ptr.vmem [resolvable:$true] %s215
      %221 = dma.vmem_to_hbm [thread:$0]  %s216, 256, %s5, [#allocation12], 128, 128, 8
    $region45: #{tpu_custom_call.1} parent=1 // pred_fallthru
      _
    // Predicated region
    $region46: #{tpu_custom_call.1} parent=1 // pred_check
      _
    $region47: #{tpu_custom_call.1} parent=1 // pred_check_branch
      %223 = sbr.rel (0) target = $region49
    $region48: #{tpu_custom_call.1} parent=1 // pred_region
      %s225 = ssub.s32 32, 32
      %226 = vsyncadd [#allocation12], %s225
      %s227 = sshll.u32 [#allocation13], 4
      %s228 = int_to_ptr.vmem [resolvable:$true] %s227
      %233 = dma.vmem_to_hbm [thread:$0]  %s228, 32, %s6, [#allocation12], 16, 16, 1
    $region49: #{tpu_custom_call.1} parent=1 // pred_fallthru
      _
    // Predicated region
    $region50: #{tpu_custom_call.1} parent=1 // pred_check
      _
    $region51: #{tpu_custom_call.1} parent=1 // pred_check_branch
      %235 = sbr.rel (0) target = $region53
    $region52: #{tpu_custom_call.1} parent=1 // pred_region
      %236 = dma.done [#allocation4], 256
    $region53: #{tpu_custom_call.1} parent=1 // pred_fallthru
      _
    // Predicated region
    $region54: #{tpu_custom_call.1} parent=1 // pred_check
      _
    $region55: #{tpu_custom_call.1} parent=1 // pred_check_branch
      %238 = sbr.rel (0) target = $region57
    $region56: #{tpu_custom_call.1} parent=1 // pred_region
      %239 = dma.done [#allocation12], 256
    $region57: #{tpu_custom_call.1} parent=1 // pred_fallthru
      _
    // Predicated region
    $region58: #{tpu_custom_call.1} parent=1 // pred_check
      _
    $region59: #{tpu_custom_call.1} parent=1 // pred_check_branch
      %241 = sbr.rel (0) target = $region61
    $region60: #{tpu_custom_call.1} parent=1 // pred_region
      %242 = dma.done [#allocation12], 32
    $region61: #{tpu_custom_call.1} parent=1 // pred_fallthru
      _
    %243 = vsyncpa [#allocation3], 1
    %244 = vsyncpa [#allocation8], 1
    %245 = vsyncpa [#allocation4], 1
    %246 = vsyncpa [#allocation12], 1
    %247 = vsyncpa [#allocation5], 1

</llo_original>
